<compile_context>
chip_gen: v6e
topology: v6e:2x2x1
jax: 0.10.0
libtpu: 0.0.40
codegen_flags: <defaults>
</compile_context>

<pallas_src>
import math
import jax
import jax.numpy as jnp
from jax.experimental import pallas as pl
from jax.experimental.pallas import tpu as pltpu


# -----------------------------------------------------------------------------
# Kernels
# -----------------------------------------------------------------------------
def _gconv_bias_kernel(x_ref, w_ref, bias_ref, o_ref):
    # x_ref:    (B, H*N)    bf16 input, (node, in_feat) flattened
    # w_ref:    (H*N, W*M)  bf16 adj-folded weights (single matmul operand)
    # bias_ref: (1, W*M)    f32 bias broadcast over target nodes
    # o_ref:    (B, W*M)    f32 output (lane-dense last dim)
    o_ref[...] = (
        jnp.dot(x_ref[...], w_ref[...], preferred_element_type=jnp.float32)
        + bias_ref[...]
    )


def _gconv_kernel(x_ref, w_ref, o_ref):
    o_ref[...] = jnp.dot(x_ref[...], w_ref[...], preferred_element_type=jnp.float32)


# -----------------------------------------------------------------------------
# Init-time parameter transform (runs ONCE; results are cached device arrays)
# -----------------------------------------------------------------------------
def init_no_sharing_graph_conv(W, adj, bias=None, *, operand_dtype=jnp.bfloat16):
    """Precompute the adj-folded, matmul-ready weights and the bias row.

    W:    (H, W, N, M) f32 parameter
    adj:  (H, W)       f32 constant buffer
    bias: (M,)         f32 parameter or None
    """
    H, Wn, N, M = W.shape
    Wp = adj[:, :, None, None].astype(jnp.float32) * W.astype(jnp.float32)  # (H,W,N,M)
    Wp_flat = (
        jnp.transpose(Wp, (0, 2, 1, 3)).reshape(H * N, Wn * M).astype(operand_dtype)
    )
    if bias is not None:
        bias_flat = jnp.broadcast_to(
            bias.astype(jnp.float32)[None, :], (Wn, M)
        ).reshape(1, Wn * M)
    else:
        bias_flat = None
    return {
        "Wp_flat": jax.device_put(Wp_flat),
        "bias_flat": None if bias_flat is None else jax.device_put(bias_flat),
        "dims": (H, Wn, N, M),
    }


# -----------------------------------------------------------------------------
# Forward (hot path)
# -----------------------------------------------------------------------------
def no_sharing_graph_conv_forward(x, params):
    """x: (B, H, N) f32  ->  (B, W, M) f32."""
    H, Wn, N, M = params["dims"]
    Wp_flat = params["Wp_flat"]
    bias_flat = params["bias_flat"]

    B = x.shape[0]
    K = H * N
    P = Wn * M

    # Free reshape + tiny cast (B*K elements); weights are already matmul-ready.
    x_flat = x.reshape(B, K).astype(Wp_flat.dtype)

    bias_bytes = 0 if bias_flat is None else bias_flat.size * 4
    cost = pl.CostEstimate(
        flops=2 * B * K * P,
        transcendentals=0,
        bytes_accessed=(
            x_flat.size * x_flat.dtype.itemsize
            + Wp_flat.size * Wp_flat.dtype.itemsize
            + bias_bytes
            + B * P * 4
        ),
    )

    vmem = pl.BlockSpec(memory_space=pltpu.MemorySpace.VMEM)
    out_shape = jax.ShapeDtypeStruct((B, P), jnp.float32)

    if bias_flat is not None:
        out_flat = pl.pallas_call(
            _gconv_bias_kernel,
            out_shape=out_shape,
            in_specs=[vmem, vmem, vmem],
            out_specs=vmem,
            cost_estimate=cost,
        )(x_flat, Wp_flat, bias_flat)
    else:
        out_flat = pl.pallas_call(
            _gconv_kernel,
            out_shape=out_shape,
            in_specs=[vmem, vmem],
            out_specs=vmem,
            cost_estimate=cost,
        )(x_flat, Wp_flat)

    return out_flat.reshape(B, Wn, M)


# -----------------------------------------------------------------------------
# Pure-JAX reference (mirrors the PyTorch forward)
# -----------------------------------------------------------------------------
def _reference(x, W, adj, bias=None):
    h0 = jnp.einsum('bhn,hwnm->bhwm', x, W)
    out = jnp.einsum('hw,bhwm->bwm', adj, h0)
    if bias is not None:
        out = out + bias[None, None, :]
    return out


if __name__ == "__main__":
    B, n_pts, in_features, out_features = 2, 8, 16, 32

    key = jax.random.PRNGKey(0)
    k_x, k_w, k_adj, k_b = jax.random.split(key, 4)

    # Deterministic parameter init mirroring the module's __init__.
    # W: xavier_uniform_(gain=1.414) over (n_pts, n_pts, in, out)
    rf = in_features * out_features
    fan_in = n_pts * rf
    fan_out = n_pts * rf
    gain = 1.414
    a = gain * math.sqrt(6.0 / (fan_in + fan_out))
    W = jax.random.uniform(
        k_w, (n_pts, n_pts, in_features, out_features),
        minval=-a, maxval=a, dtype=jnp.float32)

    # bias: uniform(-stdv, stdv), stdv = 1/sqrt(in_features)
    stdv = 1.0 / math.sqrt(in_features)
    bias = jax.random.uniform(
        k_b, (out_features,), minval=-stdv, maxval=stdv, dtype=jnp.float32)

    # adj buffer and input
    adj = jax.random.uniform(k_adj, (n_pts, n_pts), dtype=jnp.float32)
    x = jax.random.normal(k_x, (B, n_pts, in_features), dtype=jnp.float32)

    # --- bias path -----------------------------------------------------------
    params = init_no_sharing_graph_conv(W, adj, bias)          # one-time
    out = jax.block_until_ready(no_sharing_graph_conv_forward(x, params))
    ref = _reference(x, W, adj, bias)
    assert out.shape == (B, n_pts, out_features), out.shape
    # bf16 operands / f32 accumulation -> looser tolerance than pure f32.
    assert jnp.allclose(out, ref, atol=2e-2, rtol=2e-2), \
        float(jnp.max(jnp.abs(out - ref)))

    # --- bias=None path (gated kernel variant) -------------------------------
    params_nb = init_no_sharing_graph_conv(W, adj, None)       # one-time
    out_nb = jax.block_until_ready(no_sharing_graph_conv_forward(x, params_nb))
    ref_nb = _reference(x, W, adj, None)
    assert jnp.allclose(out_nb, ref_nb, atol=2e-2, rtol=2e-2), \
        float(jnp.max(jnp.abs(out_nb - ref_nb)))

    print("KERNEL_OK")
</pallas_src>

<mosaic_0001>
module attributes {stable_mosaic.version = 11 : i64} {
  func.func @_gconv_bias_kernel(%arg0: memref<2x128xbf16, #tpu.memory_space<vmem>>, %arg1: memref<128x256xbf16, #tpu.memory_space<vmem>>, %arg2: memref<1x256xf32, #tpu.memory_space<vmem>>, %arg3: memref<2x256xf32, #tpu.memory_space<vmem>>) attributes {dimension_semantics = [], scalar_prefetch = 0 : i64, scratch_operands = 0 : i64, tpu.core_type = #tpu.core_type<tc>} {
    %c0 = arith.constant 0 : index
    %c0_0 = arith.constant 0 : index
    %0 = vector.load %arg0[%c0, %c0_0] : memref<2x128xbf16, #tpu.memory_space<vmem>>, vector<2x128xbf16>
    %c0_1 = arith.constant 0 : index
    %c0_2 = arith.constant 0 : index
    %1 = vector.load %arg1[%c0_1, %c0_2] : memref<128x256xbf16, #tpu.memory_space<vmem>>, vector<128x256xbf16>
    %cst = arith.constant dense<0.000000e+00> : vector<2x256xf32>
    %2 = tpu.matmul %0, %1, %cst {dimension_numbers = #tpu.dot_dimension_numbers<[1], [0], [0], [1], [0, 0, 1, 1], [], []>} : vector<2x128xbf16>, vector<128x256xbf16>, vector<2x256xf32> -> vector<2x256xf32>
    %c0_3 = arith.constant 0 : index
    %c0_4 = arith.constant 0 : index
    %3 = vector.load %arg2[%c0_3, %c0_4] : memref<1x256xf32, #tpu.memory_space<vmem>>, vector<1x256xf32>
    %4 = vector.broadcast %3 : vector<1x256xf32> to vector<2x256xf32>
    %5 = arith.addf %2, %4 : vector<2x256xf32>
    %c0_5 = arith.constant 0 : index
    %c0_6 = arith.constant 0 : index
    %6 = vector.load %arg3[%c0_5, %c0_6] : memref<2x256xf32, #tpu.memory_space<vmem>>, vector<2x256xf32>
    tpu.vector_store %arg3[%c0_5, %c0_6], %5 {strides = array<i32>} : memref<2x256xf32, #tpu.memory_space<vmem>>, vector<2x256xf32>,
    return
  }
}

</mosaic_0001>

<llo_original>
// kernel: tpu_custom_call.1
$region0: #{tpu_custom_call.1}
  #allocation0 [shape = 'u32[]', space=smem, size = 0x4, offset = 0x4, fixed_abs, tag = 'smem constant byte address 0x4 - core index']
  #allocation1 [shape = 'u32[144,128]{1,0:T(1,128)}', space=vmem, size = 0x12000, scoped, tag = 'internal scratch']
  %s0 = inlined_call_operand.hbm [shape: bf16[2,128], index: 0, kind: input, shape index: {}]
  %s1 = inlined_call_operand.hbm [shape: bf16[128,256], index: 1, kind: input, shape index: {}]
  %s2 = inlined_call_operand.vmem [shape: f32[1,256], index: 2, kind: input, shape index: {}]
  %s3 = inlined_call_operand.hbm [shape: f32[2,256], index: 3, kind: output, shape index: {}]
  %s4 = sld [smem:[#allocation0]]
  $region30: #{tpu_custom_call.1} parent=0
    _
  %s6 = ssub.s32 1, %s4
  %s7 = scalar_select 0, %s6, %s4
  $region1: #{tpu_custom_call.1} parent=0
    #allocation2 [shape = 'u8[512]{0}', space=vmem, size = 0x400, scoped, tag = 'input window, operand 0, single buffered']
    #allocation3 [shape = 's32[1]{0}', space=sflag, size = 0x4, scoped, tag = 'scoped memory for tpu_custom_call.1']
    #allocation4 [shape = 's32[1]{0}', space=sflag, size = 0x4, scoped, tag = 'scoped memory for tpu_custom_call.1']
    #allocation5 [shape = 'u8[65536]{0}', space=vmem, size = 0x10000, scoped, tag = 'input window, operand 1, single buffered']
    #allocation6 [shape = 's32[1]{0}', space=sflag, size = 0x4, scoped, tag = 'scoped memory for tpu_custom_call.1']
    #allocation7 [shape = 'u8[2048]{0}', space=vmem, size = 0x800, scoped, tag = 'output window, operand 0, single buffered']
    %8 = vsyncpa [#allocation3], 0
    %9 = vsyncpa [#allocation6], 0
    %10 = vsyncpa [#allocation4], 0
    // Predicated region
    $region2: #{tpu_custom_call.1} parent=1 // pred_check
      _
    $region3: #{tpu_custom_call.1} parent=1 // pred_check_branch
      %12 = sbr.rel (0) target = $region5
    $region4: #{tpu_custom_call.1} parent=1 // pred_region
      %s14 = ssub.s32 16, 16
      %15 = vsyncadd [#allocation3], %s14
      %s17 = sshll.u32 [#allocation2], 4
      %s18 = int_to_ptr.vmem [resolvable:$true] %s17
      %20 = dma.hbm_to_vmem [thread:$0]  %s0, 16, %s18, [#allocation3]
    $region5: #{tpu_custom_call.1} parent=1 // pred_fallthru
      _
    // Predicated region
    $region6: #{tpu_custom_call.1} parent=1 // pred_check
      _
    $region7: #{tpu_custom_call.1} parent=1 // pred_check_branch
      %22 = sbr.rel (0) target = $region9
    $region8: #{tpu_custom_call.1} parent=1 // pred_region
      %s24 = ssub.s32 2048, 2048
      %25 = vsyncadd [#allocation6], %s24
      %s26 = sshll.u32 [#allocation5], 4
      %s27 = int_to_ptr.vmem [resolvable:$true] %s26
      %32 = dma.hbm_to_vmem [thread:$0]  %s1, 2048, %s27, [#allocation6], 128, 128, 8
    $region9: #{tpu_custom_call.1} parent=1 // pred_fallthru
      _
    // Predicated region
    $region10: #{tpu_custom_call.1} parent=1 // pred_check
      _
    $region11: #{tpu_custom_call.1} parent=1 // pred_check_branch
      %34 = sbr.rel (0) target = $region13
    $region12: #{tpu_custom_call.1} parent=1 // pred_region
      _
    $region13: #{tpu_custom_call.1} parent=1 // pred_fallthru
      _
    // Predicated region
    $region14: #{tpu_custom_call.1} parent=1 // pred_check
      _
    $region15: #{tpu_custom_call.1} parent=1 // pred_check_branch
      %36 = sbr.rel (0) target = $region17
    $region16: #{tpu_custom_call.1} parent=1 // pred_region
      %37 = dma.done [#allocation3], 16
    $region17: #{tpu_custom_call.1} parent=1 // pred_fallthru
      _
    // Predicated region
    $region18: #{tpu_custom_call.1} parent=1 // pred_check
      _
    $region19: #{tpu_custom_call.1} parent=1 // pred_check_branch
      %39 = sbr.rel (0) target = $region21
    $region20: #{tpu_custom_call.1} parent=1 // pred_region
      %40 = dma.done [#allocation6], 2048
    $region21: #{tpu_custom_call.1} parent=1 // pred_fallthru
      _
    %v42 = vld [vmem:[#allocation2] sm:$0x1]
    %v43 = vld [vmem:[#allocation5] sm:$0xff]
    %v44 = vld [vmem:[#allocation5 + $0x8] sm:$0xff]
    %v45 = vld [vmem:[#allocation5 + $0x10] sm:$0xff]
    %v46 = vld [vmem:[#allocation5 + $0x18] sm:$0xff]
    %v47 = vld [vmem:[#allocation5 + $0x20] sm:$0xff]
    %v48 = vld [vmem:[#allocation5 + $0x28] sm:$0xff]
    %v49 = vld [vmem:[#allocation5 + $0x30] sm:$0xff]
    %v50 = vld [vmem:[#allocation5 + $0x38] sm:$0xff]
    %v51 = vld [vmem:[#allocation5 + $0x40] sm:$0xff]
    %v52 = vld [vmem:[#allocation5 + $0x48] sm:$0xff]
    %v53 = vld [vmem:[#allocation5 + $0x50] sm:$0xff]
    %v54 = vld [vmem:[#allocation5 + $0x58] sm:$0xff]
    %v55 = vld [vmem:[#allocation5 + $0x60] sm:$0xff]
    %v56 = vld [vmem:[#allocation5 + $0x68] sm:$0xff]
    %v57 = vld [vmem:[#allocation5 + $0x70] sm:$0xff]
    %v58 = vld [vmem:[#allocation5 + $0x78] sm:$0xff]
    %v59 = vld [vmem:[%s2] sm:$0x3]
    %v61 = vlaneseq
    %v62 = vshrl.u32 %v61, 7
    %v63 = vsub.s32 0, %v62
    %v64 = vrot.slane %v59, %v63
    %v65 = vlaneseq
    %v66 = vshrl.u32 %v65, 7
    %v67 = vsub.s32 1, %v66
    %v68 = vrot.slane %v59, %v67
    %v87 = vunpack.c.l.b16 %v43
    %v88 = vunpack.c.h.b16 %v43
    %v89 = vunpack.c.l.b16 %v44
    %v90 = vunpack.c.h.b16 %v44
    %v91 = vunpack.c.l.b16 %v45
    %v92 = vunpack.c.h.b16 %v45
    %v93 = vunpack.c.l.b16 %v46
    %v94 = vunpack.c.h.b16 %v46
    %v95 = vunpack.c.l.b16 %v47
    %v96 = vunpack.c.h.b16 %v47
    %v97 = vunpack.c.l.b16 %v48
    %v98 = vunpack.c.h.b16 %v48
    %v99 = vunpack.c.l.b16 %v49
    %v100 = vunpack.c.h.b16 %v49
    %v101 = vunpack.c.l.b16 %v50
    %v102 = vunpack.c.h.b16 %v50
    %v103 = vunpack.c.l.b16 %v51
    %v104 = vunpack.c.h.b16 %v51
    %v105 = vunpack.c.l.b16 %v52
    %v106 = vunpack.c.h.b16 %v52
    %v107 = vunpack.c.l.b16 %v53
    %v108 = vunpack.c.h.b16 %v53
    %v109 = vunpack.c.l.b16 %v54
    %v110 = vunpack.c.h.b16 %v54
    %v111 = vunpack.c.l.b16 %v55
    %v112 = vunpack.c.h.b16 %v55
    %v113 = vunpack.c.l.b16 %v56
    %v114 = vunpack.c.h.b16 %v56
    %v115 = vunpack.c.l.b16 %v57
    %v116 = vunpack.c.h.b16 %v57
    %v117 = vunpack.c.l.b16 %v58
    %v118 = vunpack.c.h.b16 %v58
    %v119 = vpack.c.b16 %v89, %v87
    %v120 = vpack.c.b16 %v90, %v88
    %v121 = vpack.c.b16 %v93, %v91
    %v122 = vpack.c.b16 %v94, %v92
    %v123 = vpack.c.b16 %v97, %v95
    %v124 = vpack.c.b16 %v98, %v96
    %v125 = vpack.c.b16 %v101, %v99
    %v126 = vpack.c.b16 %v102, %v100
    %v127 = vpack.c.b16 %v105, %v103
    %v128 = vpack.c.b16 %v106, %v104
    %v129 = vpack.c.b16 %v109, %v107
    %v130 = vpack.c.b16 %v110, %v108
    %v131 = vpack.c.b16 %v113, %v111
    %v132 = vpack.c.b16 %v114, %v112
    %v133 = vpack.c.b16 %v117, %v115
    %v134 = vpack.c.b16 %v118, %v116
    %151 = vmatprep.subr.bf16.mxu0 %v134
    %152 = vmatpush1.bf16.msra.mxu0 %v133
    %153 = vmatprep.subr.bf16.mxu0 %v132
    %154 = vmatpush1.bf16.msra.mxu0 %v131
    %155 = vmatprep.subr.bf16.mxu0 %v130
    %156 = vmatpush1.bf16.msra.mxu0 %v129
    %157 = vmatprep.subr.bf16.mxu0 %v128
    %158 = vmatpush1.bf16.msra.mxu0 %v127
    %159 = vmatprep.subr.bf16.mxu0 %v126
    %160 = vmatpush1.bf16.msra.mxu0 %v125
    %161 = vmatprep.subr.bf16.mxu0 %v124
    %162 = vmatpush1.bf16.msra.mxu0 %v123
    %163 = vmatprep.subr.bf16.mxu0 %v122
    %164 = vmatpush1.bf16.msra.mxu0 %v121
    %165 = vmatprep.subr.bf16.mxu0 %v120
    %166 = vmatpush1.bf16.msra.mxu0 %v119
    %167 = vmatprep.subr.bf16.mxu0 0
    %168 = vmatpush2.bf16.msra.mxu0 0
    %169 = vmatprep.subr.bf16.mxu0 0
    %170 = vmatpush2.bf16.msra.mxu0 0
    %171 = vmatprep.subr.bf16.mxu0 0
    %172 = vmatpush2.bf16.msra.mxu0 0
    %173 = vmatprep.subr.bf16.mxu0 0
    %174 = vmatpush2.bf16.msra.mxu0 0
    %175 = vmatprep.subr.bf16.mxu0 0
    %176 = vmatpush2.bf16.msra.mxu0 0
    %177 = vmatprep.subr.bf16.mxu0 0
    %178 = vmatpush2.bf16.msra.mxu0 0
    %179 = vmatprep.subr.bf16.mxu0 0
    %180 = vmatpush2.bf16.msra.mxu0 0
    %181 = vmatprep.subr.bf16.mxu0 0
    %182 = vmatpush2.bf16.msra.mxu0 0
    %183 = vmatprep.mubr.bf16.mxu0 0
    %184 = vmatmul.mubr.bf16.gmra.mxu0 %v42
    %v185 = vpop.f32.mrf.mxu0
    %v186 = vadd.f32 %v64, %v185
    %v187 = vpop.f32.mrf.mxu0
    %v188 = vadd.f32 %v68, %v187
    %v189 = vpop.f32.mrf.mxu0
    %v190 = vpop.f32.mrf.mxu0
    %191 = vdwg.mxu0
    %v194 = vcombine.low %v186, %v188
    %v196 = vunpack.c.l.s4 1983009808
    %v197 = vunpack.c.0.s8 %v196
    %v198 = vlaneseq
    %v199 = vshrl.u32 %v198, 7
    %v200 = vsub.s32 %v197, %v199
    %v201 = vrot.slane %v194, %v200
    %203 = vst [vmem:[#allocation7] sm:$0xf] %v201
    // Predicated region
    $region22: #{tpu_custom_call.1} parent=1 // pred_check
      _
    $region23: #{tpu_custom_call.1} parent=1 // pred_check_branch
      %205 = sbr.rel (0) target = $region25
    $region24: #{tpu_custom_call.1} parent=1 // pred_region
      %s207 = ssub.s32 64, 64
      %208 = vsyncadd [#allocation4], %s207
      %s210 = sshll.u32 [#allocation7], 4
      %s211 = int_to_ptr.vmem [resolvable:$true] %s210
      %213 = dma.vmem_to_hbm [thread:$0]  %s211, 64, %s3, [#allocation4]
    $region25: #{tpu_custom_call.1} parent=1 // pred_fallthru
      _
    // Predicated region
    $region26: #{tpu_custom_call.1} parent=1 // pred_check
      _
    $region27: #{tpu_custom_call.1} parent=1 // pred_check_branch
      %215 = sbr.rel (0) target = $region29
    $region28: #{tpu_custom_call.1} parent=1 // pred_region
      %216 = dma.done [#allocation4], 64
    $region29: #{tpu_custom_call.1} parent=1 // pred_fallthru
      _
    %217 = vsyncpa [#allocation3], 1
    %218 = vsyncpa [#allocation6], 1
    %219 = vsyncpa [#allocation4], 1

</llo_original>
